<compile_context>
chip_gen: v6e
topology: v6e:2x2x1
jax: 0.10.0
libtpu: 0.0.40
codegen_flags: <defaults>
</compile_context>

<pallas_src>
import functools

import jax
import jax.numpy as jnp
from jax.experimental import pallas as pl
from jax.experimental.pallas import tpu as pltpu

_PAD_NEG = 1e9  # "c" value for padded rule columns -> exp(-1e9) == 0 in f32


def _round_up(x, m):
    return -(-x // m) * m


def bp_fnn_kernel(data_ref, rhs_ref, eps_ref, w4_ref, b4_ref, out_ref, *, rp):
    x = data_ref[...]                                              # (TB, F)
    tb = x.shape[0]

    # Fused LHS: [x | x*x | 1]  -> one MXU pass produces expo and out3.
    lhs = jnp.concatenate(
        [x, x * x, jnp.ones((tb, 1), jnp.float32)], axis=1)        # (TB, 2F+1)
    fused = jnp.dot(lhs, rhs_ref[...],
                    preferred_element_type=jnp.float32)            # (TB, 2*Rp)

    expo = fused[:, :rp]       # sum_f -(x-mu)^2 * a   (padded cols: -1e9)
    out3 = fused[:, rp:]       # x @ W3^T + b3          (padded cols: 0)

    # Firing strengths; padded columns get eps=0 so they vanish from the sum.
    rule = jnp.exp(expo) + eps_ref[...]                            # (TB, Rp)

    # Normalization: EUP reciprocal + one Newton step (stays within f32 tol).
    s = jnp.sum(rule, axis=-1, keepdims=True)                      # (TB, 1)
    inv = pl.reciprocal(s, approx=True)
    inv = inv * (2.0 - s * inv)

    combined = (rule * inv) * out3                                 # (TB, Rp)

    # layer4 computed directly in (O, TB) orientation: W4 @ combined^T.
    # (MXU trans-rhs contraction; keeps the output store lane-dense in batch.)
    out_t = jax.lax.dot_general(
        w4_ref[...], combined, (((1,), (1,)), ((), ())),
        preferred_element_type=jnp.float32)                        # (O, TB)
    out_ref[...] = out_t + b4_ref[...]                             # + b4 (O,1)


@functools.partial(jax.jit, static_argnames=("batch_tile",))
def bp_fnn_forward(data, para_mu, para_sigma, w3, b3, w4, b4, *,
                   batch_tile=2048):
    """data: (B, n_fea); w3: (n_rules, n_fea); w4: (n_output, n_rules)."""
    data = jnp.asarray(data, jnp.float32)
    B, F = data.shape
    R = para_mu.shape[0]
    O = w4.shape[0]

    # ---- parameter-only preprocessing hoisted out of the kernel ----
    mu = jnp.asarray(para_mu, jnp.float32)
    sigma = jnp.asarray(para_sigma, jnp.float32)
    sigma_c = jnp.log(0.01 + jnp.exp(sigma))        # matches the PyTorch source
    a = 1.0 / (2.0 * sigma_c * sigma_c)             # (R, F)
    ma = mu * a                                     # (R, F)
    c = jnp.sum(mu * mu * a, axis=1)                # (R,)

    # ---- lane-dense padding of the rule dimension (multiple of 128) ----
    Rp = _round_up(R, 128)
    pad_r = Rp - R

    def pad_rules(m):                               # (R, X) -> (Rp, X), zeros
        return jnp.pad(m, ((0, pad_r), (0, 0)))

    # Fused RHS (2F+1, 2*Rp):  expo block | out3 block.
    two_ma_t = pad_rules(2.0 * ma).T                                     # (F, Rp)
    neg_a_t = pad_rules(-a).T                                            # (F, Rp)
    neg_c_row = jnp.pad(-c, (0, pad_r),
                        constant_values=-_PAD_NEG)[None, :]              # (1, Rp)
    w3_t = pad_rules(jnp.asarray(w3, jnp.float32)).T                     # (F, Rp)
    b3_row = jnp.pad(jnp.asarray(b3, jnp.float32), (0, pad_r))[None, :]  # (1, Rp)
    rhs = jnp.concatenate(
        [jnp.concatenate([two_ma_t, w3_t], axis=1),
         jnp.concatenate([neg_a_t, jnp.zeros((F, Rp), jnp.float32)], axis=1),
         jnp.concatenate([neg_c_row, b3_row], axis=1)],
        axis=0)                                                          # (2F+1, 2Rp)

    # Per-column epsilon: 1e-5 for real rules, 0 for padded rules.
    eps = jnp.where(jnp.arange(Rp) < R, 1e-5, 0.0).astype(jnp.float32)[None, :]

    w4_p = jnp.pad(jnp.asarray(w4, jnp.float32), ((0, 0), (0, pad_r)))   # (O, Rp)
    b4_col = jnp.asarray(b4, jnp.float32)[:, None]                       # (O, 1)

    # ---- batch tiling ----
    # Small batches: one resident tile.  Larger batches: lane-dense tiles
    # (multiple of 128) with >= 2 grid steps so v7x can shard across its two
    # TensorCores.  At batch_tile=2048 the double-buffered VMEM footprint is
    # only a few MiB, well inside every generation's scoped VMEM budget.
    B8 = _round_up(B, 8)
    if B8 <= 256:
        TB = B8
    else:
        TB = min(_round_up(batch_tile, 128), _round_up(-(-B8 // 2), 128))
    Bp = _round_up(B, TB)
    data_p = jnp.pad(data, ((0, Bp - B), (0, 0)))
    n_steps = Bp // TB

    K = 2 * F + 1
    cost = pl.CostEstimate(
        flops=2 * Bp * K * (2 * Rp) + 2 * Bp * Rp * O,
        transcendentals=Bp * Rp + Bp,
        bytes_accessed=Bp * (F + O) * 4 + (K * 2 * Rp + Rp + O * Rp + O) * 4,
    )

    def resident(shape):  # full block, constant index -> stays VMEM-resident
        return pl.BlockSpec(shape, lambda i: (0, 0))

    out_t = pl.pallas_call(
        functools.partial(bp_fnn_kernel, rp=Rp),
        out_shape=jax.ShapeDtypeStruct((O, Bp), jnp.float32),
        grid=(n_steps,),
        in_specs=[
            pl.BlockSpec((TB, F), lambda i: (i, 0)),   # data (batch-tiled)
            resident((K, 2 * Rp)),                     # fused RHS
            resident((1, Rp)),                         # per-column epsilon
            resident((O, Rp)),                         # W4 (padded rules)
            resident((O, 1)),                          # b4 column
        ],
        out_specs=pl.BlockSpec((O, TB), lambda i: (0, i)),
        compiler_params=pltpu.CompilerParams(
            dimension_semantics=("parallel",)),
        cost_estimate=cost,
    )(data_p, rhs, eps, w4_p, b4_col)

    return out_t.T[:B]


if __name__ == "__main__":
    # Small shapes consistent with the module's forward.
    B, n_fea, n_rules, n_output = 8, 16, 32, 4

    key = jax.random.PRNGKey(0)
    k_data, k_mu, k_w3, k_b3, k_w4, k_b4 = jax.random.split(key, 6)

    data = jax.random.normal(k_data, (B, n_fea), jnp.float32)

    # Deterministic parameter init mirroring __init__ shapes:
    para_mu = jax.random.uniform(k_mu, (n_rules, n_fea), jnp.float32)   # torch.rand
    para_sigma = jnp.ones((n_rules, n_fea), jnp.float32)                # torch.ones
    # nn.Linear-style uniform init U(-1/sqrt(fan_in), 1/sqrt(fan_in)).
    lim3 = 1.0 / jnp.sqrt(jnp.float32(n_fea))
    w3 = jax.random.uniform(k_w3, (n_rules, n_fea), jnp.float32, -lim3, lim3)
    b3 = jax.random.uniform(k_b3, (n_rules,), jnp.float32, -lim3, lim3)
    lim4 = 1.0 / jnp.sqrt(jnp.float32(n_rules))
    w4 = jax.random.uniform(k_w4, (n_output, n_rules), jnp.float32, -lim4, lim4)
    b4 = jax.random.uniform(k_b4, (n_output,), jnp.float32, -lim4, lim4)

    result = bp_fnn_forward(data, para_mu, para_sigma, w3, b3, w4, b4)
    result = jax.block_until_ready(result)

    # Mirrors the module's NaN sniff-and-print.
    if bool(jnp.any(jnp.isnan(result))):
        print("there is some dirty data in the final result")

    # Pure-JAX reference for a sanity check.
    sigma_c = jnp.log(0.01 + jnp.exp(para_sigma))
    fuzz = jnp.exp(-(data[:, None, :] - para_mu[None]) ** 2 / (2 * sigma_c ** 2)[None])
    rule = jnp.prod(fuzz, axis=2) + 1e-5
    norm = rule / jnp.sum(rule, axis=1, keepdims=True)
    ref = (norm * (data @ w3.T + b3)) @ w4.T + b4
    # Slightly relaxed tolerance: the fused quadratic-form MXU reformulation
    # rounds differently from the elementwise reference (and PyTorch's
    # transient f64 promotion).
    assert jnp.allclose(result, ref, atol=1e-4, rtol=1e-4), "mismatch vs reference"

    print("KERNEL_OK")
</pallas_src>

<mosaic_0001>
module attributes {stable_mosaic.version = 11 : i64} {
  func.func @bp_fnn_kernel(%arg0: i32, %arg1: memref<8x16xf32, #tpu.memory_space<vmem>>, %arg2: memref<33x256xf32, #tpu.memory_space<vmem>>, %arg3: memref<1x128xf32, #tpu.memory_space<vmem>>, %arg4: memref<4x128xf32, #tpu.memory_space<vmem>>, %arg5: memref<4x1xf32, #tpu.memory_space<vmem>>, %arg6: memref<4x8xf32, #tpu.memory_space<vmem>>) attributes {dimension_semantics = [#tpu.dimension_semantics<parallel>], iteration_bounds = array<i64: 1>, scalar_prefetch = 0 : i64, scratch_operands = 0 : i64, tpu.core_type = #tpu.core_type<tc>, window_params = [{transform_indices = @transform_0, window_bounds = array<i64: 8, 16>}, {pipeline_mode = #tpu.pipeline_mode<synchronous>, transform_indices = @transform_1, window_bounds = array<i64: 33, 256>}, {pipeline_mode = #tpu.pipeline_mode<synchronous>, transform_indices = @transform_2, window_bounds = array<i64: 1, 128>}, {pipeline_mode = #tpu.pipeline_mode<synchronous>, transform_indices = @transform_3, window_bounds = array<i64: 4, 128>}, {pipeline_mode = #tpu.pipeline_mode<synchronous>, transform_indices = @transform_4, window_bounds = array<i64: 4, 1>}, {transform_indices = @transform_5, window_bounds = array<i64: 4, 8>}]} {
    %c0 = arith.constant 0 : index
    %c0_0 = arith.constant 0 : index
    %0 = vector.load %arg1[%c0, %c0_0] : memref<8x16xf32, #tpu.memory_space<vmem>>, vector<8x16xf32>
    %1 = arith.mulf %0, %0 : vector<8x16xf32>
    %cst = arith.constant 1.000000e+00 : f32
    %2 = vector.broadcast %cst : f32 to vector<8x1xf32>
    %3 = tpu.concatenate %0, %1, %2 in 1 : vector<8x16xf32>, vector<8x16xf32>, vector<8x1xf32> -> vector<8x33xf32>
    %c0_1 = arith.constant 0 : index
    %c0_2 = arith.constant 0 : index
    %4 = vector.load %arg2[%c0_1, %c0_2] : memref<33x256xf32, #tpu.memory_space<vmem>>, vector<33x256xf32>
    %cst_3 = arith.constant dense<0.000000e+00> : vector<8x256xf32>
    %5 = tpu.matmul %3, %4, %cst_3 {dimension_numbers = #tpu.dot_dimension_numbers<[1], [0], [0], [1], [0, 0, 1, 1], [], []>} : vector<8x33xf32>, vector<33x256xf32>, vector<8x256xf32> -> vector<8x256xf32>
    %6 = vector.extract_strided_slice %5 {offsets = [0, 0], sizes = [8, 128], strides = [1, 1]} : vector<8x256xf32> to vector<8x128xf32>
    %7 = vector.extract_strided_slice %5 {offsets = [0, 128], sizes = [8, 128], strides = [1, 1]} : vector<8x256xf32> to vector<8x128xf32>
    %8 = math.exp %6 : vector<8x128xf32>
    %c0_4 = arith.constant 0 : index
    %c0_5 = arith.constant 0 : index
    %9 = vector.load %arg3[%c0_4, %c0_5] : memref<1x128xf32, #tpu.memory_space<vmem>>, vector<1x128xf32>
    %10 = vector.broadcast %9 : vector<1x128xf32> to vector<8x128xf32>
    %11 = arith.addf %8, %10 : vector<8x128xf32>
    %cst_6 = arith.constant dense<0.000000e+00> : vector<8xf32>
    %12 = vector.multi_reduction <add>, %11, %cst_6 [1] : vector<8x128xf32> to vector<8xf32>
    %13 = vector.shape_cast %12 : vector<8xf32> to vector<8x1xf32>
    %14 = tpu.reciprocal %13 {approx = true} : vector<8x1xf32> -> vector<8x1xf32>
    %15 = arith.mulf %13, %14 : vector<8x1xf32>
    %cst_7 = arith.constant 2.000000e+00 : f32
    %16 = vector.broadcast %cst_7 : f32 to vector<8x1xf32>
    %17 = arith.subf %16, %15 : vector<8x1xf32>
    %18 = arith.mulf %14, %17 : vector<8x1xf32>
    %19 = vector.broadcast %18 : vector<8x1xf32> to vector<8x128xf32>
    %20 = arith.mulf %11, %19 : vector<8x128xf32>
    %21 = arith.mulf %20, %7 : vector<8x128xf32>
    %c0_8 = arith.constant 0 : index
    %c0_9 = arith.constant 0 : index
    %22 = vector.load %arg4[%c0_8, %c0_9] : memref<4x128xf32, #tpu.memory_space<vmem>>, vector<4x128xf32>
    %cst_10 = arith.constant dense<0.000000e+00> : vector<4x8xf32>
    %23 = tpu.matmul %22, %21, %cst_10 {dimension_numbers = #tpu.dot_dimension_numbers<[1], [1], [0], [0], [0, 0, 1, 0], [], []>} : vector<4x128xf32>, vector<8x128xf32>, vector<4x8xf32> -> vector<4x8xf32>
    %c0_11 = arith.constant 0 : index
    %c0_12 = arith.constant 0 : index
    %24 = vector.load %arg5[%c0_11, %c0_12] : memref<4x1xf32, #tpu.memory_space<vmem>>, vector<4x1xf32>
    %25 = vector.broadcast %24 : vector<4x1xf32> to vector<4x8xf32>
    %26 = arith.addf %23, %25 : vector<4x8xf32>
    %c0_13 = arith.constant 0 : index
    %c0_14 = arith.constant 0 : index
    %27 = vector.load %arg6[%c0_13, %c0_14] : memref<4x8xf32, #tpu.memory_space<vmem>>, vector<4x8xf32>
    tpu.vector_store %arg6[%c0_13, %c0_14], %26 {strides = array<i32>} : memref<4x8xf32, #tpu.memory_space<vmem>>, vector<4x8xf32>,
    return
  }
  func.func @transform_0(%arg0: i32) -> (i32, i32) {
    %c0_i32 = arith.constant 0 : i32
    %c0_i32_0 = arith.constant 0 : i32
    return %arg0, %c0_i32 : i32, i32
  }
  func.func @transform_1(%arg0: i32) -> (i32, i32) {
    %c0_i32 = arith.constant 0 : i32
    %c0_i32_0 = arith.constant 0 : i32
    %c0_i32_1 = arith.constant 0 : i32
    return %c0_i32, %c0_i32_0 : i32, i32
  }
  func.func @transform_2(%arg0: i32) -> (i32, i32) {
    %c0_i32 = arith.constant 0 : i32
    %c0_i32_0 = arith.constant 0 : i32
    %c0_i32_1 = arith.constant 0 : i32
    return %c0_i32, %c0_i32_0 : i32, i32
  }
  func.func @transform_3(%arg0: i32) -> (i32, i32) {
    %c0_i32 = arith.constant 0 : i32
    %c0_i32_0 = arith.constant 0 : i32
    %c0_i32_1 = arith.constant 0 : i32
    return %c0_i32, %c0_i32_0 : i32, i32
  }
  func.func @transform_4(%arg0: i32) -> (i32, i32) {
    %c0_i32 = arith.constant 0 : i32
    %c0_i32_0 = arith.constant 0 : i32
    %c0_i32_1 = arith.constant 0 : i32
    return %c0_i32, %c0_i32_0 : i32, i32
  }
  func.func @transform_5(%arg0: i32) -> (i32, i32) {
    %c0_i32 = arith.constant 0 : i32
    %c0_i32_0 = arith.constant 0 : i32
    return %c0_i32, %arg0 : i32, i32
  }
}

</mosaic_0001>

<llo_original>
// kernel: neg.3
$region0: #{neg.3}
  #allocation0 [shape = 's32[1]{0}', space=sflag, size = 0x4, scoped, tag = 'scoped memory for neg.3']
  %s0 = inlined_call_operand.vmem [shape: f32[32], index: 0, kind: input, shape index: {}]
  %s1 = inlined_call_operand.vmem [shape: f32[32], index: 1, kind: output, shape index: {}]
  %v2 = vld [vmem:[%s0] sm:$0x1]
  %3 = xla_tuple %v2
  %4 = xla_tuple %3
  %v5 = vxor.u32 %v2, 2147483648
  %6 = xla_tuple %v5
  %7 = vst [vmem:[%s1] sm:$0x1] %v5

// kernel: bp_fnn_forward.1
$region0: #{bp_fnn_forward.1}
  #allocation0 [shape = 'u32[]', space=smem, size = 0x4, offset = 0x4, fixed_abs, tag = 'smem constant byte address 0x4 - core index']
  #allocation1 [shape = 'u32[144,128]{1,0:T(1,128)}', space=vmem, size = 0x12000, scoped, tag = 'internal scratch']
  %s0 = inlined_call_operand.vmem [shape: f32[8,16], index: 0, kind: input, shape index: {}]
  %s1 = inlined_call_operand.vmem [shape: f32[33,256], index: 1, kind: input, shape index: {}]
  %s2 = inlined_call_operand.vmem [shape: f32[1,128], index: 2, kind: input, shape index: {}]
  %s3 = inlined_call_operand.vmem [shape: f32[4,128], index: 3, kind: input, shape index: {}]
  %s4 = inlined_call_operand.vmem [shape: f32[4,1], index: 4, kind: input, shape index: {}]
  %s5 = inlined_call_operand.hbm [shape: f32[4,8], index: 5, kind: output, shape index: {}]
  %s6 = sld [smem:[#allocation0]]
  $region30: #{bp_fnn_forward.1} parent=0
    _
  %s8 = ssub.s32 1, %s6
  %s9 = scalar_select 0, %s8, %s6
  $region1: #{bp_fnn_forward.1} parent=0
    #allocation2 [shape = 'u8[2048]{0}', space=vmem, size = 0x800, scoped, tag = 'output window, operand 0, single buffered']
    #allocation3 [shape = 's32[1]{0}', space=sflag, size = 0x4, scoped, tag = 'scoped memory for bp_fnn_forward.1']
    %10 = vsyncpa [#allocation3], 0
    // Predicated region
    $region2: #{bp_fnn_forward.1} parent=1 // pred_check
      _
    $region3: #{bp_fnn_forward.1} parent=1 // pred_check_branch
      %12 = sbr.rel (0) target = $region5
    $region4: #{bp_fnn_forward.1} parent=1 // pred_region
      _
    $region5: #{bp_fnn_forward.1} parent=1 // pred_fallthru
      _
    // Predicated region
    $region6: #{bp_fnn_forward.1} parent=1 // pred_check
      _
    $region7: #{bp_fnn_forward.1} parent=1 // pred_check_branch
      %14 = sbr.rel (0) target = $region9
    $region8: #{bp_fnn_forward.1} parent=1 // pred_region
      _
    $region9: #{bp_fnn_forward.1} parent=1 // pred_fallthru
      _
    // Predicated region
    $region10: #{bp_fnn_forward.1} parent=1 // pred_check
      _
    $region11: #{bp_fnn_forward.1} parent=1 // pred_check_branch
      %16 = sbr.rel (0) target = $region13
    $region12: #{bp_fnn_forward.1} parent=1 // pred_region
      _
    $region13: #{bp_fnn_forward.1} parent=1 // pred_fallthru
      _
    // Predicated region
    $region14: #{bp_fnn_forward.1} parent=1 // pred_check
      _
    $region15: #{bp_fnn_forward.1} parent=1 // pred_check_branch
      %18 = sbr.rel (0) target = $region17
    $region16: #{bp_fnn_forward.1} parent=1 // pred_region
      _
    $region17: #{bp_fnn_forward.1} parent=1 // pred_fallthru
      _
    // Predicated region
    $region18: #{bp_fnn_forward.1} parent=1 // pred_check
      _
    $region19: #{bp_fnn_forward.1} parent=1 // pred_check_branch
      %20 = sbr.rel (0) target = $region21
    $region20: #{bp_fnn_forward.1} parent=1 // pred_region
      _
    $region21: #{bp_fnn_forward.1} parent=1 // pred_fallthru
      _
    %v21 = vld [vmem:[%s0] sm:$0xff]
    %v22 = vmul.f32 %v21, %v21
    %24 = vrot.lane.b32.xlu0 %v22, 16
    %v25 = vpop.permute.xlu0 %24
    %vm27 = vcmask 130048
    %v28 = vsel %vm27, %v21, %v25
    %vm29 = vcmask 261120
    %v30 = vsel %vm29, %v28, 1.0
    %v31 = vld [vmem:[%s1] sm:$0xff]
    %v32 = vld [vmem:[%s1 + $0x8] sm:$0xff]
    %v33 = vld [vmem:[%s1 + $0x10] sm:$0xff]
    %v34 = vld [vmem:[%s1 + $0x18] sm:$0xff]
    %v35 = vld [vmem:[%s1 + $0x20] sm:$0xff]
    %v36 = vld [vmem:[%s1 + $0x28] sm:$0xff]
    %v37 = vld [vmem:[%s1 + $0x30] sm:$0xff]
    %v38 = vld [vmem:[%s1 + $0x38] sm:$0xff]
    %v39 = vld [vmem:[%s1 + $0x40] sm:$0x1]
    %v40 = vld [vmem:[%s1 + $0x48] sm:$0x1]
    %vm41 = vcmask 269312
    %v43 = vsel %vm41, %v30, 0
    %vm45 = vcmask 1040384
    %v47 = vsel %vm45, %v39, 0
    %v50 = vsel %vm45, %v40, 0
    %52 = vmatprep.subr.mxu0 0.0
    %53 = vmatpush1.msra.mxu0 0.0
    %54 = vmatprep.subr.mxu0 0.0
    %55 = vmatpush1.msra.mxu0 0.0
    %56 = vmatprep.subr.mxu0 0.0
    %57 = vmatpush1.msra.mxu0 0.0
    %58 = vmatprep.subr.mxu0 0.0
    %59 = vmatpush1.msra.mxu0 0.0
    %60 = vmatprep.subr.mxu0 0.0
    %61 = vmatpush1.msra.mxu0 0.0
    %62 = vmatprep.subr.mxu0 0.0
    %63 = vmatpush1.msra.mxu0 0.0
    %64 = vmatprep.subr.mxu0 0.0
    %65 = vmatpush1.msra.mxu0 0.0
    %66 = vmatprep.subr.mxu0 0.0
    %67 = vmatpush1.msra.mxu0 0.0
    %68 = vmatprep.subr.mxu0 0.0
    %69 = vmatpush1.msra.mxu0 0.0
    %70 = vmatprep.subr.mxu0 0.0
    %71 = vmatpush1.msra.mxu0 0.0
    %72 = vmatprep.subr.mxu0 0.0
    %73 = vmatpush1.msra.mxu0 0.0
    %74 = vmatprep.subr.mxu0 %v50
    %75 = vmatpush1.msra.mxu0 %v47
    %76 = vmatprep.subr.mxu0 %v38
    %77 = vmatpush1.msra.mxu0 %v37
    %78 = vmatprep.subr.mxu0 %v36
    %79 = vmatpush1.msra.mxu0 %v35
    %80 = vmatprep.subr.mxu0 %v34
    %81 = vmatpush1.msra.mxu0 %v33
    %82 = vmatprep.subr.mxu0 %v32
    %83 = vmatpush1.msra.mxu0 %v31
    %84 = vmatprep.subr.mxu0 0.0
    %85 = vmatpush2.msra.mxu0 0.0
    %86 = vmatprep.subr.mxu0 0.0
    %87 = vmatpush2.msra.mxu0 0.0
    %88 = vmatprep.subr.mxu0 0.0
    %89 = vmatpush2.msra.mxu0 0.0
    %90 = vmatprep.subr.mxu0 0.0
    %91 = vmatpush2.msra.mxu0 0.0
    %92 = vmatprep.subr.mxu0 0.0
    %93 = vmatpush2.msra.mxu0 0.0
    %94 = vmatprep.subr.mxu0 0.0
    %95 = vmatpush2.msra.mxu0 0.0
    %96 = vmatprep.subr.mxu0 0.0
    %97 = vmatpush2.msra.mxu0 0.0
    %98 = vmatprep.subr.mxu0 0.0
    %99 = vmatpush2.msra.mxu0 0.0
    %100 = vmatprep.subr.mxu0 0.0
    %101 = vmatpush2.msra.mxu0 0.0
    %102 = vmatprep.subr.mxu0 0.0
    %103 = vmatpush2.msra.mxu0 0.0
    %104 = vmatprep.subr.mxu0 0.0
    %105 = vmatpush2.msra.mxu0 0.0
    %106 = vmatprep.subr.mxu0 0.0
    %107 = vmatpush2.msra.mxu0 0.0
    %108 = vmatprep.subr.mxu0 0.0
    %109 = vmatpush2.msra.mxu0 0.0
    %110 = vmatprep.subr.mxu0 0.0
    %111 = vmatpush2.msra.mxu0 0.0
    %112 = vmatprep.subr.mxu0 0.0
    %113 = vmatpush2.msra.mxu0 0.0
    %114 = vmatprep.subr.mxu0 0.0
    %115 = vmatpush2.msra.mxu0 0.0
    %116 = vmatprep.mubr.f32.mxu0 0.0
    %117 = vmatmul.mubr.f32.gmra.mxu0 %v43
    %v118 = vpop.f32.mrf.mxu0
    %v119 = vadd.f32 0.0, %v118
    %v120 = vpop.f32.mrf.mxu0
    %v121 = vadd.f32 0.0, %v120
    %122 = vdwg.mxu0
    %v123 = vmul.f32 %v119, 1.442695
    %v124 = vpow.pop %v123
    %v125 = vld [vmem:[%s2] sm:$0x1]
    %v127 = vlaneseq
    %v128 = vshrl.u32 %v127, 7
    %v129 = vsub.s32 0, %v128
    %v130 = vrot.slane %v125, %v129
    %v132 = vadd.f32 %v124, %v130
    %133 = vadd.xlane.f32.xlu0 %v132
    %v134 = vpop.xlane.xlu0 %133
    %v135 = vrcp.pop %v134
    %v136 = vmul.f32 %v134, %v135
    %v137 = vsub.f32 2.0, %v136
    %v138 = vmul.f32 %v135, %v137
    %v139 = vmul.f32 %v132, %v138
    %v140 = vmul.f32 %v139, %v121
    %v141 = vld [vmem:[%s3] sm:$0xf]
    %v142 = vld [vmem:[%s4] sm:$0xf]
    %144 = vset.pattern.permute.xlu0 0
    %145 = vperm.xlu0 %144, %v142
    %v146 = vpop.permute.xlu0 %145
    %148 = vmatprep.subr.mxu0 0.0
    %149 = vmatpush1.xpose.msra.mxu0 0.0
    %150 = vmatprep.subr.mxu0 0.0
    %151 = vmatpush1.xpose.msra.mxu0 0.0
    %152 = vmatprep.subr.mxu0 0.0
    %153 = vmatpush1.xpose.msra.mxu0 0.0
    %154 = vmatprep.subr.mxu0 0.0
    %155 = vmatpush1.xpose.msra.mxu0 0.0
    %156 = vmatprep.subr.mxu0 0.0
    %157 = vmatpush1.xpose.msra.mxu0 0.0
    %158 = vmatprep.subr.mxu0 0.0
    %159 = vmatpush1.xpose.msra.mxu0 0.0
    %160 = vmatprep.subr.mxu0 0.0
    %161 = vmatpush1.xpose.msra.mxu0 0.0
    %162 = vmatprep.subr.mxu0 0.0
    %163 = vmatpush1.xpose.msra.mxu0 0.0
    %164 = vmatprep.subr.mxu0 0.0
    %165 = vmatpush1.xpose.msra.mxu0 0.0
    %166 = vmatprep.subr.mxu0 0.0
    %167 = vmatpush1.xpose.msra.mxu0 0.0
    %168 = vmatprep.subr.mxu0 0.0
    %169 = vmatpush1.xpose.msra.mxu0 0.0
    %170 = vmatprep.subr.mxu0 0.0
    %171 = vmatpush1.xpose.msra.mxu0 0.0
    %172 = vmatprep.subr.mxu0 0.0
    %173 = vmatpush1.xpose.msra.mxu0 0.0
    %174 = vmatprep.subr.mxu0 0.0
    %175 = vmatpush1.xpose.msra.mxu0 0.0
    %176 = vmatprep.subr.mxu0 0.0
    %177 = vmatpush1.xpose.msra.mxu0 0.0
    %178 = vmatprep.subr.mxu0 0.0
    %179 = vmatpush1.xpose.msra.mxu0 %v140
    %180 = vmatprep.subr.mxu0 0.0
    %181 = vmatpush2.xpose.msra.mxu0 0.0
    %182 = vmatprep.subr.mxu0 0.0
    %183 = vmatpush2.xpose.msra.mxu0 0.0
    %184 = vmatprep.subr.mxu0 0.0
    %185 = vmatpush2.xpose.msra.mxu0 0.0
    %186 = vmatprep.subr.mxu0 0.0
    %187 = vmatpush2.xpose.msra.mxu0 0.0
    %188 = vmatprep.subr.mxu0 0.0
    %189 = vmatpush2.xpose.msra.mxu0 0.0
    %190 = vmatprep.subr.mxu0 0.0
    %191 = vmatpush2.xpose.msra.mxu0 0.0
    %192 = vmatprep.subr.mxu0 0.0
    %193 = vmatpush2.xpose.msra.mxu0 0.0
    %194 = vmatprep.subr.mxu0 0.0
    %195 = vmatpush2.xpose.msra.mxu0 0.0
    %196 = vmatprep.subr.mxu0 0.0
    %197 = vmatpush2.xpose.msra.mxu0 0.0
    %198 = vmatprep.subr.mxu0 0.0
    %199 = vmatpush2.xpose.msra.mxu0 0.0
    %200 = vmatprep.subr.mxu0 0.0
    %201 = vmatpush2.xpose.msra.mxu0 0.0
    %202 = vmatprep.subr.mxu0 0.0
    %203 = vmatpush2.xpose.msra.mxu0 0.0
    %204 = vmatprep.subr.mxu0 0.0
    %205 = vmatpush2.xpose.msra.mxu0 0.0
    %206 = vmatprep.subr.mxu0 0.0
    %207 = vmatpush2.xpose.msra.mxu0 0.0
    %208 = vmatprep.subr.mxu0 0.0
    %209 = vmatpush2.xpose.msra.mxu0 0.0
    %210 = vmatprep.subr.mxu0 0.0
    %211 = vmatpush2.xpose.msra.mxu0 0.0
    %212 = vmatprep.mubr.f32.mxu0 0.0
    %213 = vmatmul.mubr.f32.gmra.mxu0 %v141
    %v214 = vpop.f32.mrf.mxu0
    %v215 = vadd.f32 %v146, %v214
    %v216 = vpop.f32.mrf.mxu0
    %217 = vdwg.mxu0
    %vm218 = vcmask 60416
    %219 = vst.msk [vmem:[#allocation2] sm:$0xf] %vm218, %v215
    // Predicated region
    $region22: #{bp_fnn_forward.1} parent=1 // pred_check
      _
    $region23: #{bp_fnn_forward.1} parent=1 // pred_check_branch
      %221 = sbr.rel (0) target = $region25
    $region24: #{bp_fnn_forward.1} parent=1 // pred_region
      %s223 = ssub.s32 64, 64
      %224 = vsyncadd [#allocation3], %s223
      %s226 = sshll.u32 [#allocation2], 4
      %s227 = int_to_ptr.vmem [resolvable:$true] %s226
      %229 = dma.vmem_to_hbm [thread:$0]  %s227, 64, %s5, [#allocation3]
    $region25: #{bp_fnn_forward.1} parent=1 // pred_fallthru
      _
    // Predicated region
    $region26: #{bp_fnn_forward.1} parent=1 // pred_check
      _
    $region27: #{bp_fnn_forward.1} parent=1 // pred_check_branch
      %231 = sbr.rel (0) target = $region29
    $region28: #{bp_fnn_forward.1} parent=1 // pred_region
      %232 = dma.done [#allocation3], 64
    $region29: #{bp_fnn_forward.1} parent=1 // pred_fallthru
      _
    %233 = vsyncpa [#allocation3], 1

</llo_original>
